<compile_context>
chip_gen: v5e
topology: v5e:2x2
jax: 0.10.0
libtpu: 0.0.40
codegen_flags: <defaults>
</compile_context>

<pallas_src>
import numpy as np
import jax
import jax.numpy as jnp
from jax.experimental import pallas as pl
from jax.experimental.pallas import tpu as pltpu


# ---------------------------------------------------------------------------
# Pooling matrices (PyTorch adaptive_avg_pool2d window semantics).
# ---------------------------------------------------------------------------
def _adaptive_pool_matrix(in_size: int, out_size: int) -> np.ndarray:
    """P[in, out] = 1/window_len over PyTorch's adaptive window (float64)."""
    p = np.zeros((in_size, out_size), dtype=np.float64)
    for j in range(out_size):
        start = (j * in_size) // out_size
        end = -((-(j + 1) * in_size) // out_size)  # ceil((j+1)*in/out)
        p[start:end, j] = 1.0 / (end - start)
    return p


# ---------------------------------------------------------------------------
# Hardware-aware sizing helpers.
# ---------------------------------------------------------------------------
def _vmem_capacity_bytes() -> int:
    """Physical VMEM of the local chip; conservative (v7x-sized) fallback."""
    try:
        info = pltpu.get_tpu_info()
        cap = getattr(info, "vmem_capacity_bytes", None)
        if cap:
            return int(cap)
    except Exception:
        pass
    return 64 << 20


def _budgets(vmem_bytes: int):
    """(block_budget, vmem_limit_bytes, num_tensorcores) per chip generation."""
    if vmem_bytes >= (100 << 20):
        # v5e / v6e: 128 MiB VMEM, single TensorCore — use big blocks.
        return 88 << 20, 104 << 20, 1
    # v7x (or unknown/conservative): 64 MiB VMEM, 2 TensorCores.
    return 24 << 20, 48 << 20, 2


def _sublane_pack(dtype) -> int:
    """Row-tile multiple so sub-32-bit dtypes stay fully packed along sublanes."""
    return 8 * max(1, 4 // jnp.dtype(dtype).itemsize)  # 8 f32 / 16 bf16 / 32 int8


def _choose_row_tile(rows, k, m, a_item, o_item, pack, vmem_bytes):
    """Row-tile size and vmem limit for out[rows, m] = a[rows, k] @ p[k, m]."""
    budget, limit, num_tc = _budgets(vmem_bytes)

    p_bytes = k * m * 4                       # P is f32, single-buffered
    per_row = 2 * (k * a_item + m * o_item)   # double-buffered in + out blocks
    avail = max(budget - p_bytes, per_row * pack)
    cap = max(pack, (avail // per_row) // pack * pack)

    if rows <= cap:
        if num_tc == 1 or rows < 4 * pack:
            # Single full-extent block: no per-step overhead on 1-TC chips /
            # tiny problems.
            return rows, limit
        steps = 4                             # >=2 balanced blocks per v7x core
    else:
        steps = -(-rows // cap)
        if num_tc == 2:
            steps = max(4, steps + (steps & 1))   # even, >=4 (core balance)
        else:
            steps = max(3, steps)                 # >=3 so the pipeline overlaps

    per_step = -(-rows // steps)
    tr = min(cap, ((per_step + pack - 1) // pack) * pack)
    return max(pack, tr), limit


# ---------------------------------------------------------------------------
# Kernel: one row-tiled matmul  out[rows, m] = a[rows, k] @ p[k, m].
# ---------------------------------------------------------------------------
def _pool_kernel(x_ref, p_ref, o_ref):
    o_ref[...] = jnp.dot(
        x_ref[...].astype(jnp.float32),
        p_ref[...],
        preferred_element_type=jnp.float32,
    ).astype(o_ref.dtype)


def _row_matmul(a, p, vmem_bytes, out_dtype=None):
    rows, k = a.shape
    k2, m = p.shape
    assert k == k2
    out_dtype = a.dtype if out_dtype is None else out_dtype

    a_item = jnp.dtype(a.dtype).itemsize
    o_item = jnp.dtype(out_dtype).itemsize
    pack = _sublane_pack(a.dtype)

    tr, limit = _choose_row_tile(rows, k, m, a_item, o_item, pack, vmem_bytes)
    # Double-buffered blocks + single-buffered P must stay under the limit.
    assert 2 * tr * (k * a_item + m * o_item) + k * m * 4 <= limit, (
        "VMEM budget exceeded: check _choose_row_tile"
    )
    grid = (-(-rows // tr),)

    return pl.pallas_call(
        _pool_kernel,
        out_shape=jax.ShapeDtypeStruct((rows, m), out_dtype),
        grid=grid,
        in_specs=[
            pl.BlockSpec((tr, k), lambda i: (i, 0)),
            # Constant block -> never re-fetched; single-buffer it in VMEM.
            pl.BlockSpec((k, m), lambda i: (0, 0), pipeline_mode=pl.Buffered(1)),
        ],
        out_specs=pl.BlockSpec((tr, m), lambda i: (i, 0)),
        compiler_params=pltpu.CompilerParams(
            dimension_semantics=("parallel",),
            vmem_limit_bytes=limit,
        ),
    )(a, p)


# ---------------------------------------------------------------------------
# Separable fallback (large H*W * OH*OW): two small matmuls instead of kron P.
# ---------------------------------------------------------------------------
def _separable_pool(x, out_h, out_w, vmem_bytes):
    n, c, h, w = x.shape
    pw = jnp.asarray(_adaptive_pool_matrix(w, out_w), jnp.float32)
    ph = jnp.asarray(_adaptive_pool_matrix(h, out_h), jnp.float32)

    # Pass 1: pool along W.  (N*C*H, W) @ (W, OW) -> (N*C*H, OW), f32 interm.
    y = _row_matmul(x.reshape(n * c * h, w), pw, vmem_bytes, out_dtype=jnp.float32)

    # Pass 2: pool along H.  Put H last so it is the contraction axis.
    # (Transposes between passes are plain XLA layout ops in the wrapper.)
    y = y.reshape(n, c, h, out_w).transpose(0, 1, 3, 2).reshape(n * c * out_w, h)
    z = _row_matmul(y, ph, vmem_bytes, out_dtype=x.dtype)
    return z.reshape(n, c, out_w, out_h).transpose(0, 1, 3, 2)


# ---------------------------------------------------------------------------
# Public entry point (mirrors the PyTorch module's forward).
# ---------------------------------------------------------------------------
def identity_adaptive_avg_pool2d(x, output_size, inplace=False, _force_separable=False):
    """JAX/Pallas equivalent of IdentityAdaptiveAvgPool2d.forward (NCHW in/out)."""
    del inplace  # TODO(synk): `inplace` is a no-op — JAX is purely functional.
    if isinstance(output_size, int):
        out_h = out_w = output_size
    else:
        out_h, out_w = output_size

    n, c, h, w = x.shape
    hw, ohw = h * w, out_h * out_w
    rows = n * c

    vmem_bytes = _vmem_capacity_bytes()
    budget, _, _ = _budgets(vmem_bytes)
    a_item = jnp.dtype(x.dtype).itemsize
    pack = _sublane_pack(x.dtype)

    # Scaling guard: kron(Ph, Pw) must be small and the minimum fused tile must
    # fit the block budget; otherwise use the separable two-matmul form.
    p_bytes = hw * ohw * 4
    min_fused = 2 * pack * (hw * a_item + ohw * a_item) + p_bytes
    if _force_separable or p_bytes > (4 << 20) or min_fused > budget:
        return _separable_pool(x, out_h, out_w, vmem_bytes)

    # Fused Kronecker pooling matrix, kept in f32 so the 1/window weights stay
    # exact (accumulation is f32 regardless).
    ph = _adaptive_pool_matrix(h, out_h)
    pw = _adaptive_pool_matrix(w, out_w)
    p = jnp.asarray(np.kron(ph, pw), dtype=jnp.float32)  # (H*W, OH*OW)

    out = _row_matmul(x.reshape(rows, hw), p, vmem_bytes, out_dtype=x.dtype)
    return out.reshape(n, c, out_h, out_w)


# ---------------------------------------------------------------------------
# Reference + tests.
# ---------------------------------------------------------------------------
def _ref_adaptive_avg_pool2d(x_np, out_h, out_w):
    """Independent looped reference mirroring PyTorch adaptive_avg_pool2d."""
    n, c, h, w = x_np.shape
    out = np.zeros((n, c, out_h, out_w), dtype=np.float64)
    for i in range(out_h):
        hs, he = (i * h) // out_h, -((-(i + 1) * h) // out_h)
        for j in range(out_w):
            ws, we = (j * w) // out_w, -((-(j + 1) * w) // out_w)
            out[:, :, i, j] = x_np[:, :, hs:he, ws:we].mean(axis=(2, 3))
    return out


if __name__ == "__main__":
    key = jax.random.PRNGKey(0)

    # Test 1: evenly divisible case, f32 (typical module usage).
    x = jax.random.normal(key, (2, 4, 16, 16), dtype=jnp.float32)
    out = jax.block_until_ready(identity_adaptive_avg_pool2d(x, (4, 4)))
    n, c, h, w = x.shape
    ref = x.reshape(n, c, 4, h // 4, 4, w // 4).mean(axis=(3, 5))
    np.testing.assert_allclose(np.asarray(out), np.asarray(ref), rtol=1e-5, atol=1e-5)

    # Test 2: non-divisible adaptive windows (17x13 -> 5x4), fused kron path.
    x2 = jax.random.normal(jax.random.PRNGKey(0), (1, 3, 17, 13), dtype=jnp.float32)
    out2 = jax.block_until_ready(identity_adaptive_avg_pool2d(x2, (5, 4)))
    ref2 = _ref_adaptive_avg_pool2d(np.asarray(x2, dtype=np.float64), 5, 4)
    np.testing.assert_allclose(np.asarray(out2), ref2, rtol=1e-5, atol=1e-5)

    # Test 3: same shapes through the separable fallback path (exercise guard).
    out3 = jax.block_until_ready(
        identity_adaptive_avg_pool2d(x2, (5, 4), _force_separable=True)
    )
    np.testing.assert_allclose(np.asarray(out3), ref2, rtol=1e-5, atol=1e-5)

    # Test 4: bf16 input (sublane pack = 16, f32 pooling matrix keeps bias out).
    xb = jax.random.normal(key, (2, 4, 16, 16), dtype=jnp.bfloat16)
    outb = jax.block_until_ready(identity_adaptive_avg_pool2d(xb, (4, 4)))
    refb = np.asarray(xb, dtype=np.float64).reshape(2, 4, 4, 4, 4, 4).mean(axis=(3, 5))
    np.testing.assert_allclose(
        np.asarray(outb, dtype=np.float64), refb, rtol=2e-2, atol=1e-2
    )

    print("KERNEL_OK")
</pallas_src>

<mosaic_0001>
module attributes {stable_mosaic.version = 11 : i64} {
  func.func @_pool_kernel(%arg0: i32, %arg1: memref<8x256xf32, #tpu.memory_space<vmem>>, %arg2: memref<256x16xf32, #tpu.memory_space<vmem>>, %arg3: memref<8x16xf32, #tpu.memory_space<vmem>>) attributes {dimension_semantics = [#tpu.dimension_semantics<parallel>], iteration_bounds = array<i64: 1>, scalar_prefetch = 0 : i64, scratch_operands = 0 : i64, tpu.core_type = #tpu.core_type<tc>, window_params = [{transform_indices = @transform_0, window_bounds = array<i64: 8, 256>}, {pipeline_mode = #tpu.pipeline_mode<synchronous>, transform_indices = @transform_1, window_bounds = array<i64: 256, 16>}, {transform_indices = @transform_2, window_bounds = array<i64: 8, 16>}]} {
    %c0 = arith.constant 0 : index
    %c0_0 = arith.constant 0 : index
    %0 = vector.load %arg1[%c0, %c0_0] : memref<8x256xf32, #tpu.memory_space<vmem>>, vector<8x256xf32>
    %c0_1 = arith.constant 0 : index
    %c0_2 = arith.constant 0 : index
    %1 = vector.load %arg2[%c0_1, %c0_2] : memref<256x16xf32, #tpu.memory_space<vmem>>, vector<256x16xf32>
    %cst = arith.constant dense<0.000000e+00> : vector<8x16xf32>
    %2 = tpu.matmul %0, %1, %cst {dimension_numbers = #tpu.dot_dimension_numbers<[1], [0], [0], [1], [0, 0, 1, 1], [], []>} : vector<8x256xf32>, vector<256x16xf32>, vector<8x16xf32> -> vector<8x16xf32>
    %c0_3 = arith.constant 0 : index
    %c0_4 = arith.constant 0 : index
    %3 = vector.load %arg3[%c0_3, %c0_4] : memref<8x16xf32, #tpu.memory_space<vmem>>, vector<8x16xf32>
    tpu.vector_store %arg3[%c0_3, %c0_4], %2 {strides = array<i32>} : memref<8x16xf32, #tpu.memory_space<vmem>>, vector<8x16xf32>,
    return
  }
  func.func @transform_0(%arg0: i32) -> (i32, i32) {
    %c0_i32 = arith.constant 0 : i32
    %c0_i32_0 = arith.constant 0 : i32
    return %arg0, %c0_i32 : i32, i32
  }
  func.func @transform_1(%arg0: i32) -> (i32, i32) {
    %c0_i32 = arith.constant 0 : i32
    %c0_i32_0 = arith.constant 0 : i32
    %c0_i32_1 = arith.constant 0 : i32
    return %c0_i32, %c0_i32_0 : i32, i32
  }
  func.func @transform_2(%arg0: i32) -> (i32, i32) {
    %c0_i32 = arith.constant 0 : i32
    %c0_i32_0 = arith.constant 0 : i32
    return %arg0, %c0_i32 : i32, i32
  }
}

</mosaic_0001>

<llo_original>
// kernel: tpu_custom_call.1
$region0: #{tpu_custom_call.1}
  #allocation0 [shape = 'u32[]', space=smem, size = 0x4, offset = 0x4, fixed_abs, tag = 'smem constant byte address 0x4 - core index']
  #allocation1 [shape = 'u32[72,128]{1,0:T(1,128)}', space=vmem, size = 0x9000, scoped, tag = 'internal scratch']
  %s0 = inlined_call_operand.vmem [shape: f32[8,256], index: 0, kind: input, shape index: {}]
  %s1 = inlined_call_operand.vmem [shape: f32[256,16], index: 1, kind: input, shape index: {}]
  %s2 = inlined_call_operand.hbm [shape: f32[8,16], index: 2, kind: output, shape index: {}]
  %s3 = sld [smem:[#allocation0]]
  $region18: #{tpu_custom_call.1} parent=0
    _
  %s5 = ssub.s32 1, %s3
  %s6 = scalar_select 0, %s5, %s3
  $region1: #{tpu_custom_call.1} parent=0
    #allocation2 [shape = 'u8[4096]{0}', space=vmem, size = 0x1000, scoped, tag = 'output window, operand 0, single buffered']
    #allocation3 [shape = 's32[1]{0}', space=sflag, size = 0x4, scoped, tag = 'scoped memory for tpu_custom_call.1']
    %7 = vsyncpa [#allocation3], 0
    // Predicated region
    $region2: #{tpu_custom_call.1} parent=1 // pred_check
      _
    $region3: #{tpu_custom_call.1} parent=1 // pred_check_branch
      %9 = sbr.rel (0) target = $region5
    $region4: #{tpu_custom_call.1} parent=1 // pred_region
      _
    $region5: #{tpu_custom_call.1} parent=1 // pred_fallthru
      _
    // Predicated region
    $region6: #{tpu_custom_call.1} parent=1 // pred_check
      _
    $region7: #{tpu_custom_call.1} parent=1 // pred_check_branch
      %11 = sbr.rel (0) target = $region9
    $region8: #{tpu_custom_call.1} parent=1 // pred_region
      _
    $region9: #{tpu_custom_call.1} parent=1 // pred_fallthru
      _
    %v12 = vld [vmem:[%s0] sm:$0xff]
    %v13 = vld [vmem:[%s0 + $0x8] sm:$0xff]
    %v14 = vld [vmem:[%s1] sm:$0xff]
    %v15 = vld [vmem:[%s1 + $0x8] sm:$0xff]
    %v16 = vld [vmem:[%s1 + $0x10] sm:$0xff]
    %v17 = vld [vmem:[%s1 + $0x18] sm:$0xff]
    %v18 = vld [vmem:[%s1 + $0x20] sm:$0xff]
    %v19 = vld [vmem:[%s1 + $0x28] sm:$0xff]
    %v20 = vld [vmem:[%s1 + $0x30] sm:$0xff]
    %v21 = vld [vmem:[%s1 + $0x38] sm:$0xff]
    %v22 = vld [vmem:[%s1 + $0x40] sm:$0xff]
    %v23 = vld [vmem:[%s1 + $0x48] sm:$0xff]
    %v24 = vld [vmem:[%s1 + $0x50] sm:$0xff]
    %v25 = vld [vmem:[%s1 + $0x58] sm:$0xff]
    %v26 = vld [vmem:[%s1 + $0x60] sm:$0xff]
    %v27 = vld [vmem:[%s1 + $0x68] sm:$0xff]
    %v28 = vld [vmem:[%s1 + $0x70] sm:$0xff]
    %v29 = vld [vmem:[%s1 + $0x78] sm:$0xff]
    %v30 = vld [vmem:[%s1 + $0x80] sm:$0xff]
    %v31 = vld [vmem:[%s1 + $0x88] sm:$0xff]
    %v32 = vld [vmem:[%s1 + $0x90] sm:$0xff]
    %v33 = vld [vmem:[%s1 + $0x98] sm:$0xff]
    %v34 = vld [vmem:[%s1 + $0xa0] sm:$0xff]
    %v35 = vld [vmem:[%s1 + $0xa8] sm:$0xff]
    %v36 = vld [vmem:[%s1 + $0xb0] sm:$0xff]
    %v37 = vld [vmem:[%s1 + $0xb8] sm:$0xff]
    %v38 = vld [vmem:[%s1 + $0xc0] sm:$0xff]
    %v39 = vld [vmem:[%s1 + $0xc8] sm:$0xff]
    %v40 = vld [vmem:[%s1 + $0xd0] sm:$0xff]
    %v41 = vld [vmem:[%s1 + $0xd8] sm:$0xff]
    %v42 = vld [vmem:[%s1 + $0xe0] sm:$0xff]
    %v43 = vld [vmem:[%s1 + $0xe8] sm:$0xff]
    %v44 = vld [vmem:[%s1 + $0xf0] sm:$0xff]
    %v45 = vld [vmem:[%s1 + $0xf8] sm:$0xff]
    %46 = vmatpush.msra.mxu0 %v29
    %47 = vmatpush.msra.mxu0 %v28
    %48 = vmatpush.msra.mxu0 %v27
    %49 = vmatpush.msra.mxu0 %v26
    %50 = vmatpush.msra.mxu0 %v25
    %51 = vmatpush.msra.mxu0 %v24
    %52 = vmatpush.msra.mxu0 %v23
    %53 = vmatpush.msra.mxu0 %v22
    %54 = vmatpush.msra.mxu0 %v21
    %55 = vmatpush.msra.mxu0 %v20
    %56 = vmatpush.msra.mxu0 %v19
    %57 = vmatpush.msra.mxu0 %v18
    %58 = vmatpush.msra.mxu0 %v17
    %59 = vmatpush.msra.mxu0 %v16
    %60 = vmatpush.msra.mxu0 %v15
    %61 = vmatpush.msra.mxu0 %v14
    %62 = vmatmul.f32.gmra.mxu0 %v12
    %v63 = vpop.f32.mrf.mxu0
    %v64 = vadd.f32 0.0, %v63
    %65 = vdwg.mxu0
    %66 = vmatpush.msra.mxu0 %v45
    %67 = vmatpush.msra.mxu0 %v44
    %68 = vmatpush.msra.mxu0 %v43
    %69 = vmatpush.msra.mxu0 %v42
    %70 = vmatpush.msra.mxu0 %v41
    %71 = vmatpush.msra.mxu0 %v40
    %72 = vmatpush.msra.mxu0 %v39
    %73 = vmatpush.msra.mxu0 %v38
    %74 = vmatpush.msra.mxu0 %v37
    %75 = vmatpush.msra.mxu0 %v36
    %76 = vmatpush.msra.mxu0 %v35
    %77 = vmatpush.msra.mxu0 %v34
    %78 = vmatpush.msra.mxu0 %v33
    %79 = vmatpush.msra.mxu0 %v32
    %80 = vmatpush.msra.mxu0 %v31
    %81 = vmatpush.msra.mxu0 %v30
    %82 = vmatmul.f32.gmra.mxu0 %v13
    %v83 = vpop.f32.mrf.mxu0
    %v84 = vadd.f32 %v64, %v83
    %85 = vdwg.mxu0
    %vm86 = vcmask 130048
    %87 = vst.msk [vmem:[#allocation2] sm:$0xff] %vm86, %v84
    // Predicated region
    $region10: #{tpu_custom_call.1} parent=1 // pred_check
      _
    $region11: #{tpu_custom_call.1} parent=1 // pred_check_branch
      %89 = sbr.rel (0) target = $region13
    $region12: #{tpu_custom_call.1} parent=1 // pred_region
      %91 = vsyncadd [#allocation3], 0
      %s93 = sshll.u32 [#allocation2], 4
      %s94 = int_to_ptr.vmem [resolvable:$true] %s93
      %s95 = sshll.u32 %s2, 4
      %s96 = int_to_ptr.hbm [resolvable:$true] %s95
      %98 = dma.vmem_to_hbm [thread:$0]  %s94, 128, %s96, [#allocation3]
    $region13: #{tpu_custom_call.1} parent=1 // pred_fallthru
      _
    // Predicated region
    $region14: #{tpu_custom_call.1} parent=1 // pred_check
      _
    $region15: #{tpu_custom_call.1} parent=1 // pred_check_branch
      %100 = sbr.rel (0) target = $region17
    $region16: #{tpu_custom_call.1} parent=1 // pred_region
      %102 = dma.done [#allocation3], 128
    $region17: #{tpu_custom_call.1} parent=1 // pred_fallthru
      _
    %103 = vsyncpa [#allocation3], 1

</llo_original>
